<compile_context>
chip_gen: v7x
topology: tpu7x:2x2x1
jax: 0.10.0
libtpu: 0.0.40
codegen_flags: <defaults>
</compile_context>

<pallas_src>
import math

import jax
import jax.numpy as jnp
from jax.experimental import pallas as pl
from jax.experimental.pallas import tpu as pltpu


def _cdiv(a, b):
    return -(-a // b)


def _round_up(x, m):
    return _cdiv(x, m) * m


def _ar_kernel(x_ref, w_ref, b_ref, o_ref):
    # x_ref: (tile, K) VMEM input rows
    # w_ref: (K, G)    VMEM block-diagonal folded weight (constant index -> fetched once)
    # b_ref: (1, 1)    SMEM bias scalar
    # o_ref: (tile, G) VMEM output rows
    acc = jnp.dot(x_ref[...].astype(jnp.float32), w_ref[...],
                  preferred_element_type=jnp.float32)
    o_ref[...] = (acc + b_ref[0, 0]).astype(o_ref.dtype)


def ar_model_forward(X, weight, bias, *, block_bytes=4 * 1024 * 1024):
    """X: (B, L, O, D); weight: (1, L); bias: (1,). Returns (B, 1, O, D)."""
    B, L, O, D = X.shape
    M = O * D
    N = B * M                                  # number of outputs
    dtype = X.dtype
    itemsize = jnp.dtype(dtype).itemsize
    # packed-sublane granularity of the input dtype (8 f32 / 16 bf16 / 32 int8)
    row_align = max(8, 32 // max(1, itemsize))

    # ---- slab row width: lane-dense folded layout ---------------------------
    K = 128 * L // math.gcd(L, 128)            # lcm(L, 128)
    G = K // L                                 # outputs per slab row
    if K > 16384 or K * G * 4 > 8 * 1024 * 1024:
        # TODO(synk): lane-sparse fallback for L whose lcm(L,128) is too large
        # to fold; blocks then carry only L useful lanes.
        K, G = L, 1

    # ---- (R, K) slab view of the flat input (free reshape; rare tail pad) ----
    flat = X.reshape(-1)                       # same memory order as torch .view
    total = N * L
    R = _cdiv(total, K)
    pad = R * K - total
    if pad:
        # Only when N*L is not a multiple of K (never for the K=L fallback).
        flat = jnp.pad(flat, (0, pad))
    Xd = flat.reshape(R, K)

    # ---- row tiling (ragged grid, no padding of the row dimension) -----------
    tile = max(row_align,
               (block_bytes // max(1, K * itemsize)) // row_align * row_align)
    if tile >= R:
        tile = R                               # single full-extent block (always legal)
    g_rows = _cdiv(R, tile)
    # v7x megacore: expose >=2 "parallel" steps when there is real work so both
    # TensorCores stream independent halves of the slab.
    if g_rows == 1 and R >= 2 * row_align and R * K * itemsize > (1 << 20):
        tile = _round_up(_cdiv(R, 2), row_align)
        g_rows = _cdiv(R, tile)

    # ---- folded weight (block diagonal) & bias -------------------------------
    w = weight.reshape(L).astype(jnp.float32)
    w_fold = jnp.kron(jnp.eye(G, dtype=jnp.float32), w.reshape(L, 1))   # (K, G)
    b2 = bias.reshape(1, 1).astype(jnp.float32)

    cost = pl.CostEstimate(
        flops=2 * N * L + N,
        transcendentals=0,
        bytes_accessed=R * K * itemsize + R * G * itemsize + K * G * 4,
    )

    out = pl.pallas_call(
        _ar_kernel,
        out_shape=jax.ShapeDtypeStruct((R, G), dtype),
        grid=(g_rows,),
        in_specs=[
            pl.BlockSpec((tile, K), lambda i: (i, 0)),
            pl.BlockSpec((K, G), lambda i: (0, 0)),      # constant -> DMA'd once
            pl.BlockSpec(memory_space=pltpu.MemorySpace.SMEM),
        ],
        out_specs=pl.BlockSpec((tile, G), lambda i: (i, 0)),
        compiler_params=pltpu.CompilerParams(
            dimension_semantics=("parallel",),
            vmem_limit_bytes=48 * 1024 * 1024,
        ),
        cost_estimate=cost,
    )(Xd, w_fold, b2)

    out = out.reshape(-1)
    if out.shape[0] != N:                      # only when the input tail was padded
        out = out[:N]
    return out.reshape(B, 1, O, D)


def _reference_forward(X, weight, bias):
    # Pure-JAX reference mirroring the PyTorch module exactly (exact f32 math,
    # no MXU, so it is independent of matmul precision policy).
    B, L, O, D = X.shape
    X2 = X.reshape(B, O * D, L).astype(jnp.float32)      # raw reinterpretation, like .view
    w = weight.reshape(L).astype(jnp.float32)
    out = (X2 * w[None, None, :]).sum(axis=-1) + bias.astype(jnp.float32)[0]
    return out.astype(X.dtype).reshape(B, 1, O, D)


def _check(out, ref):
    # Tolerance allows for possible bf16-pass rounding inside the MXU while
    # still catching any structural/indexing error (which would be O(1)).
    assert out.shape == ref.shape, (out.shape, ref.shape)
    assert jnp.allclose(out, ref, atol=2e-2, rtol=2e-2), "mismatch vs reference"


if __name__ == "__main__":
    key = jax.random.PRNGKey(0)
    kx, kw, kb = jax.random.split(key, 3)

    fwd = jax.jit(ar_model_forward, static_argnames=("block_bytes",))

    # Small shapes consistent with the module: X is (B, L=seq_len, O, D).
    B, L, O, D = 2, 8, 4, 16
    X = jax.random.normal(kx, (B, L, O, D), dtype=jnp.float32)
    bound = 1.0 / (L ** 0.5)
    weight = jax.random.uniform(kw, (1, L), jnp.float32, -bound, bound)
    bias = jax.random.uniform(kb, (1,), jnp.float32, -bound, bound)

    out = fwd(X, weight, bias)
    jax.block_until_ready(out)
    _check(out, _reference_forward(X, weight, bias))

    # Multi-step ragged grid, no padding (N*L % 128 == 0, R % tile != 0).
    B2, L2, O2, D2 = 3, 8, 5, 16
    X2 = jax.random.normal(kx, (B2, L2, O2, D2), dtype=jnp.float32)
    w2 = jax.random.uniform(kw, (1, L2), jnp.float32, -bound, bound)
    out2 = fwd(X2, w2, bias, block_bytes=4096)
    jax.block_until_ready(out2)
    _check(out2, _reference_forward(X2, w2, bias))

    # Padded-tail case (N*L not a multiple of 128) + trailing-output slice.
    B3, L3, O3, D3 = 1, 8, 5, 10
    X3 = jax.random.normal(kx, (B3, L3, O3, D3), dtype=jnp.float32)
    w3 = jax.random.uniform(kw, (1, L3), jnp.float32, -bound, bound)
    out3 = fwd(X3, w3, bias)
    jax.block_until_ready(out3)
    _check(out3, _reference_forward(X3, w3, bias))

    # seq_len that does not divide 128: lane-dense folded path with K=lcm(12,128)=384.
    B4, L4, O4, D4 = 2, 12, 4, 16
    X4 = jax.random.normal(kx, (B4, L4, O4, D4), dtype=jnp.float32)
    w4 = jax.random.uniform(kw, (1, L4), jnp.float32, -bound, bound)
    out4 = fwd(X4, w4, bias)
    jax.block_until_ready(out4)
    _check(out4, _reference_forward(X4, w4, bias))

    # Pathological seq_len (huge lcm with 128): K=L fallback path.
    B5, L5, O5, D5 = 2, 254, 3, 8
    X5 = jax.random.normal(kx, (B5, L5, O5, D5), dtype=jnp.float32)
    w5 = jax.random.uniform(kw, (1, L5), jnp.float32, -1.0 / (L5 ** 0.5), 1.0 / (L5 ** 0.5))
    out5 = fwd(X5, w5, bias)
    jax.block_until_ready(out5)
    _check(out5, _reference_forward(X5, w5, bias))

    print("KERNEL_OK")
</pallas_src>

<mosaic_0001>
module attributes {stable_mosaic.version = 11 : i64} {
  func.func @_ar_kernel(%arg0: i32, %arg1: memref<8x128xf32, #tpu.memory_space<vmem>>, %arg2: memref<128x16xf32, #tpu.memory_space<vmem>>, %arg3: memref<1x1xf32, #tpu.memory_space<smem>>, %arg4: memref<8x16xf32, #tpu.memory_space<vmem>>) attributes {dimension_semantics = [#tpu.dimension_semantics<parallel>], iteration_bounds = array<i64: 1>, scalar_prefetch = 0 : i64, scratch_operands = 0 : i64, tpu.core_type = #tpu.core_type<tc>, window_params = [{transform_indices = @transform_0, window_bounds = array<i64: 8, 128>}, {pipeline_mode = #tpu.pipeline_mode<synchronous>, transform_indices = @transform_1, window_bounds = array<i64: 128, 16>}, {transform_indices = @transform_2, window_bounds = array<i64: 1, 1>}, {transform_indices = @transform_3, window_bounds = array<i64: 8, 16>}]} {
    %c0 = arith.constant 0 : index
    %c0_0 = arith.constant 0 : index
    %0 = vector.load %arg1[%c0, %c0_0] : memref<8x128xf32, #tpu.memory_space<vmem>>, vector<8x128xf32>
    %c0_1 = arith.constant 0 : index
    %c0_2 = arith.constant 0 : index
    %1 = vector.load %arg2[%c0_1, %c0_2] : memref<128x16xf32, #tpu.memory_space<vmem>>, vector<128x16xf32>
    %cst = arith.constant dense<0.000000e+00> : vector<8x16xf32>
    %2 = tpu.matmul %0, %1, %cst {dimension_numbers = #tpu.dot_dimension_numbers<[1], [0], [0], [1], [0, 0, 1, 1], [], []>} : vector<8x128xf32>, vector<128x16xf32>, vector<8x16xf32> -> vector<8x16xf32>
    %c0_3 = arith.constant 0 : index
    %c0_4 = arith.constant 0 : index
    %3 = memref.load %arg3[%c0_3, %c0_4] : memref<1x1xf32, #tpu.memory_space<smem>>
    %4 = vector.broadcast %3 : f32 to vector<8x16xf32>
    %5 = arith.addf %2, %4 : vector<8x16xf32>
    %c0_5 = arith.constant 0 : index
    %c0_6 = arith.constant 0 : index
    %6 = vector.load %arg4[%c0_5, %c0_6] : memref<8x16xf32, #tpu.memory_space<vmem>>, vector<8x16xf32>
    tpu.vector_store %arg4[%c0_5, %c0_6], %5 {strides = array<i32>} : memref<8x16xf32, #tpu.memory_space<vmem>>, vector<8x16xf32>,
    return
  }
  func.func @transform_0(%arg0: i32) -> (i32, i32) {
    %c0_i32 = arith.constant 0 : i32
    %c0_i32_0 = arith.constant 0 : i32
    return %arg0, %c0_i32 : i32, i32
  }
  func.func @transform_1(%arg0: i32) -> (i32, i32) {
    %c0_i32 = arith.constant 0 : i32
    %c0_i32_0 = arith.constant 0 : i32
    %c0_i32_1 = arith.constant 0 : i32
    return %c0_i32, %c0_i32_0 : i32, i32
  }
  func.func @transform_2(%arg0: i32) -> (i32, i32) {
    %c0_i32 = arith.constant 0 : i32
    %c0_i32_0 = arith.constant 0 : i32
    %c0_i32_1 = arith.constant 0 : i32
    return %c0_i32, %c0_i32_0 : i32, i32
  }
  func.func @transform_3(%arg0: i32) -> (i32, i32) {
    %c0_i32 = arith.constant 0 : i32
    %c0_i32_0 = arith.constant 0 : i32
    return %arg0, %c0_i32 : i32, i32
  }
}

</mosaic_0001>

<llo_original>
// kernel: ar_model_forward.1
$region0: #{ar_model_forward.1}
  #allocation0 [shape = 'u32[]', space=smem, size = 0x4, offset = 0x4, fixed_abs, tag = 'smem constant byte address 0x4 - core index']
  #allocation1 [shape = 'u32[144,128]{1,0:T(1,128)}', space=vmem, size = 0x12000, scoped, tag = 'internal scratch']
  #allocation2 [shape = 'f32[1,1]{1,0:T(1,128)S(6)}', space=smem, size = 0x200, scoped, tag = 'scoped memory for ar_model_forward.1']
  %s0 = inlined_call_operand.vmem [shape: f32[8,128], index: 0, kind: input, shape index: {}]
  %s1 = inlined_call_operand.vmem [shape: f32[128,16], index: 1, kind: input, shape index: {}]
  %s2 = inlined_call_operand.<no memory space> [shape: f32[1,1], index: 2, kind: input, shape index: {}]
  %s3 = inlined_call_operand.hbm [shape: f32[8,16], index: 3, kind: output, shape index: {}]
  %s4 = sld [smem:[#allocation0]]
  $region22: #{ar_model_forward.1} parent=0
    _
  %s6 = ssub.s32 1, %s4
  %s7 = scalar_select 0, %s6, %s4
  %8 = sst [smem:[#allocation2]] %s2
  $region1: #{ar_model_forward.1} parent=0
    #allocation3 [shape = 'u8[4096]{0}', space=vmem, size = 0x1000, scoped, tag = 'output window, operand 0, single buffered']
    #allocation4 [shape = 's32[1]{0}', space=sflag, size = 0x4, scoped, tag = 'scoped memory for ar_model_forward.1']
    %9 = vsyncpa [#allocation4], 0
    // Predicated region
    $region2: #{ar_model_forward.1} parent=1 // pred_check
      _
    $region3: #{ar_model_forward.1} parent=1 // pred_check_branch
      %11 = sbr.rel (0) target = $region5
    $region4: #{ar_model_forward.1} parent=1 // pred_region
      _
    $region5: #{ar_model_forward.1} parent=1 // pred_fallthru
      _
    // Predicated region
    $region6: #{ar_model_forward.1} parent=1 // pred_check
      _
    $region7: #{ar_model_forward.1} parent=1 // pred_check_branch
      %13 = sbr.rel (0) target = $region9
    $region8: #{ar_model_forward.1} parent=1 // pred_region
      _
    $region9: #{ar_model_forward.1} parent=1 // pred_fallthru
      _
    // Predicated region
    $region10: #{ar_model_forward.1} parent=1 // pred_check
      _
    $region11: #{ar_model_forward.1} parent=1 // pred_check_branch
      %15 = sbr.rel (0) target = $region13
    $region12: #{ar_model_forward.1} parent=1 // pred_region
      _
    $region13: #{ar_model_forward.1} parent=1 // pred_fallthru
      _
    %v16 = vld [vmem:[%s0] sm:$0xff]
    %v17 = vld [vmem:[%s1] sm:$0xff]
    %v18 = vld [vmem:[%s1 + $0x8] sm:$0xff]
    %v19 = vld [vmem:[%s1 + $0x10] sm:$0xff]
    %v20 = vld [vmem:[%s1 + $0x18] sm:$0xff]
    %v21 = vld [vmem:[%s1 + $0x20] sm:$0xff]
    %v22 = vld [vmem:[%s1 + $0x28] sm:$0xff]
    %v23 = vld [vmem:[%s1 + $0x30] sm:$0xff]
    %v24 = vld [vmem:[%s1 + $0x38] sm:$0xff]
    %v25 = vld [vmem:[%s1 + $0x40] sm:$0xff]
    %v26 = vld [vmem:[%s1 + $0x48] sm:$0xff]
    %v27 = vld [vmem:[%s1 + $0x50] sm:$0xff]
    %v28 = vld [vmem:[%s1 + $0x58] sm:$0xff]
    %v29 = vld [vmem:[%s1 + $0x60] sm:$0xff]
    %v30 = vld [vmem:[%s1 + $0x68] sm:$0xff]
    %v31 = vld [vmem:[%s1 + $0x70] sm:$0xff]
    %v32 = vld [vmem:[%s1 + $0x78] sm:$0xff]
    %s33 = sld [smem:[#allocation2]]
    %v34 = vstv %s33
    %35 = vmatprep.subr.mxu0 0.0
    %36 = vmatpush1.msra.mxu0 %v17
    %37 = vmatprep.subr.mxu0 0.0
    %38 = vmatpush1.msra.mxu0 %v18
    %39 = vmatprep.subr.mxu0 0.0
    %40 = vmatpush1.msra.mxu0 %v19
    %41 = vmatprep.subr.mxu0 0.0
    %42 = vmatpush1.msra.mxu0 %v20
    %43 = vmatprep.subr.mxu0 0.0
    %44 = vmatpush1.msra.mxu0 %v21
    %45 = vmatprep.subr.mxu0 0.0
    %46 = vmatpush1.msra.mxu0 %v22
    %47 = vmatprep.subr.mxu0 0.0
    %48 = vmatpush1.msra.mxu0 %v23
    %49 = vmatprep.subr.mxu0 0.0
    %50 = vmatpush1.msra.mxu0 %v24
    %51 = vmatprep.subr.mxu0 0.0
    %52 = vmatpush1.msra.mxu0 %v25
    %53 = vmatprep.subr.mxu0 0.0
    %54 = vmatpush1.msra.mxu0 %v26
    %55 = vmatprep.subr.mxu0 0.0
    %56 = vmatpush1.msra.mxu0 %v27
    %57 = vmatprep.subr.mxu0 0.0
    %58 = vmatpush1.msra.mxu0 %v28
    %59 = vmatprep.subr.mxu0 0.0
    %60 = vmatpush1.msra.mxu0 %v29
    %61 = vmatprep.subr.mxu0 0.0
    %62 = vmatpush1.msra.mxu0 %v30
    %63 = vmatprep.subr.mxu0 0.0
    %64 = vmatpush1.msra.mxu0 %v31
    %65 = vmatprep.subr.mxu0 0.0
    %66 = vmatpush1.msra.mxu0 %v32
    %67 = vmatprep.subr.mxu0 0.0
    %68 = vmatpush1.msra.mxu0 0.0
    %69 = vmatprep.subr.mxu0 0.0
    %70 = vmatpush1.msra.mxu0 0.0
    %71 = vmatprep.subr.mxu0 0.0
    %72 = vmatpush1.msra.mxu0 0.0
    %73 = vmatprep.subr.mxu0 0.0
    %74 = vmatpush1.msra.mxu0 0.0
    %75 = vmatprep.subr.mxu0 0.0
    %76 = vmatpush1.msra.mxu0 0.0
    %77 = vmatprep.subr.mxu0 0.0
    %78 = vmatpush1.msra.mxu0 0.0
    %79 = vmatprep.subr.mxu0 0.0
    %80 = vmatpush1.msra.mxu0 0.0
    %81 = vmatprep.subr.mxu0 0.0
    %82 = vmatpush1.msra.mxu0 0.0
    %83 = vmatprep.subr.mxu0 0.0
    %84 = vmatpush1.msra.mxu0 0.0
    %85 = vmatprep.subr.mxu0 0.0
    %86 = vmatpush1.msra.mxu0 0.0
    %87 = vmatprep.subr.mxu0 0.0
    %88 = vmatpush1.msra.mxu0 0.0
    %89 = vmatprep.subr.mxu0 0.0
    %90 = vmatpush1.msra.mxu0 0.0
    %91 = vmatprep.subr.mxu0 0.0
    %92 = vmatpush1.msra.mxu0 0.0
    %93 = vmatprep.subr.mxu0 0.0
    %94 = vmatpush1.msra.mxu0 0.0
    %95 = vmatprep.subr.mxu0 0.0
    %96 = vmatpush1.msra.mxu0 0.0
    %97 = vmatprep.subr.mxu0 0.0
    %98 = vmatpush1.msra.mxu0 0.0
    %99 = vmatprep.mubr.f32.mxu0 0.0
    %100 = vmatmul.mubr.f32.gmra.mrb[0].mxu0 %v16
    %v101 = vpop.f32.mrb[0].mxu0
    %v102 = vadd.f32 %v34, %v101
    %v103 = vpop.f32.mrb[0].mxu0
    %104 = vdwg.mxu0
    %vm105 = vcmask 130048
    %106 = vst.msk [vmem:[#allocation3] sm:$0xff] %vm105, %v102
    // Predicated region
    $region14: #{ar_model_forward.1} parent=1 // pred_check
      _
    $region15: #{ar_model_forward.1} parent=1 // pred_check_branch
      %108 = sbr.rel (0) target = $region17
    $region16: #{ar_model_forward.1} parent=1 // pred_region
      %s110 = ssub.s32 128, 128
      %111 = vsyncadd [#allocation4], %s110
      %s113 = sshll.u32 [#allocation3], 4
      %s114 = int_to_ptr.vmem [resolvable:$true] %s113
      %116 = dma.vmem_to_hbm [thread:$0]  %s114, 128, %s3, [#allocation4]
    $region17: #{ar_model_forward.1} parent=1 // pred_fallthru
      _
    // Predicated region
    $region18: #{ar_model_forward.1} parent=1 // pred_check
      _
    $region19: #{ar_model_forward.1} parent=1 // pred_check_branch
      %118 = sbr.rel (0) target = $region21
    $region20: #{ar_model_forward.1} parent=1 // pred_region
      %119 = dma.done [#allocation4], 128
    $region21: #{ar_model_forward.1} parent=1 // pred_fallthru
      _
    %120 = vsyncpa [#allocation4], 1

</llo_original>
